<compile_context>
chip_gen: v6e
topology: v6e:2x2x1
jax: 0.10.0
libtpu: 0.0.40
codegen_flags: <defaults>
</compile_context>

<pallas_src>
import jax
import jax.numpy as jnp
from jax.experimental import pallas as pl
from jax.experimental.pallas import tpu as pltpu


def _frozen_bn_kernel(params_ref, x_ref, o_ref):
    """Elementwise hot path: out = x * scale + shift.

    params_ref : (row_block, 2)  per-row [scale, shift] in the compute dtype
    x_ref/o_ref: (row_block, hw_block) activation tile
    """
    scale = params_ref[:, 0:1]
    shift = params_ref[:, 1:2]
    o_ref[...] = (x_ref[...] * scale + shift).astype(o_ref.dtype)


def _round_up(x, m):
    return ((x + m - 1) // m) * m


def _cdiv(a, b):
    return (a + b - 1) // b


def _target_tile_bytes():
    """Per-buffer tile budget: ~2 MiB on v7x (64 MiB VMEM), ~4 MiB on v5e/v6e."""
    target = 2 * 1024 * 1024
    try:
        info = pltpu.get_tpu_info()
        if getattr(info, "vmem_capacity_bytes", 0) >= 100 * 1024 * 1024:
            target = 4 * 1024 * 1024
    except Exception:
        pass
    return target


def frozen_batch_norm_2d(x, weight, bias, running_mean, running_var, eps=1e-5):
    """FrozenBatchNorm2d forward. x: (N, C, H, W); params: (C,)."""
    N, C, H, W = x.shape
    NC, HW = N * C, H * W
    itemsize = jnp.dtype(x.dtype).itemsize
    sublane = {4: 8, 2: 16, 1: 32}.get(itemsize, 8)

    # bf16 activations -> bf16 affine (v6e/v7x VPU has bf16); otherwise f32.
    compute_dtype = jnp.bfloat16 if x.dtype == jnp.bfloat16 else jnp.float32

    # Fold frozen stats into per-channel affine (tiny XLA op, done in f32).
    scale = weight.astype(jnp.float32) * jax.lax.rsqrt(
        running_var.astype(jnp.float32) + eps)
    shift = bias.astype(jnp.float32) - running_mean.astype(jnp.float32) * scale
    # Row r of the (N*C, HW) slab corresponds to channel r % C.
    params = jnp.stack([scale, shift], axis=-1).astype(compute_dtype)  # (C, 2)
    params = jnp.tile(params, (N, 1))                                  # (NC, 2)

    # ---- tile / grid selection (cdiv grid, masked edges; no padding) -------
    target_bytes = _target_tile_bytes()
    hw_full = _round_up(HW, 128)
    if hw_full * sublane * itemsize <= target_bytes:
        hw_block = hw_full            # whole row per tile -> contiguous HBM DMA
    else:
        hw_block = 2048               # fixed lane-dense block
    row_block = max(
        sublane, (target_bytes // (hw_block * itemsize)) // sublane * sublane)
    nc_rows = _round_up(NC, sublane)
    row_block = min(row_block, nc_rows)

    # v7x megacore: keep at least 2 blocks along some axis (prefer rows).
    if (_cdiv(NC, row_block) < 2 and _cdiv(HW, hw_block) < 4
            and nc_rows >= 2 * sublane):
        row_block = max(sublane, _round_up(nc_rows // 2, sublane))

    grid = (_cdiv(NC, row_block), _cdiv(HW, hw_block))

    x2d = x.reshape(NC, HW)
    x_spec = pl.BlockSpec((row_block, hw_block), lambda i, j: (i, j))
    p_spec = pl.BlockSpec((row_block, 2), lambda i, j: (i, 0))  # resident over HW

    tile_bytes = row_block * hw_block * itemsize
    vmem_limit = min(4 * tile_bytes + 16 * 1024 * 1024, 48 * 1024 * 1024)

    out2d = pl.pallas_call(
        _frozen_bn_kernel,
        out_shape=jax.ShapeDtypeStruct((NC, HW), x.dtype),
        grid_spec=pltpu.PrefetchScalarGridSpec(
            num_scalar_prefetch=0,
            grid=grid,
            in_specs=[p_spec, x_spec],
            out_specs=x_spec,
        ),
        compiler_params=pltpu.CompilerParams(
            dimension_semantics=("parallel", "parallel"),
            vmem_limit_bytes=vmem_limit,
        ),
    )(params, x2d)

    return out2d.reshape(N, C, H, W)


def _reference(x, weight, bias, running_mean, running_var, eps=1e-5):
    C = x.shape[1]
    w4 = weight.reshape(1, C, 1, 1).astype(jnp.float32)
    b4 = bias.reshape(1, C, 1, 1).astype(jnp.float32)
    rv4 = running_var.reshape(1, C, 1, 1).astype(jnp.float32)
    rm4 = running_mean.reshape(1, C, 1, 1).astype(jnp.float32)
    s = w4 * jax.lax.rsqrt(rv4 + eps)
    return (x.astype(jnp.float32) * s + (b4 - rm4 * s)).astype(x.dtype)


def _make_params(key, C):
    kw, kb, km, kv = jax.random.split(key, 4)
    weight = jnp.ones((C,), jnp.float32) + 0.1 * jax.random.normal(kw, (C,), jnp.float32)
    bias = 0.1 * jax.random.normal(kb, (C,), jnp.float32)
    running_mean = 0.1 * jax.random.normal(km, (C,), jnp.float32)
    running_var = jnp.ones((C,), jnp.float32) + 0.1 * jnp.abs(
        jax.random.normal(kv, (C,), jnp.float32))
    return weight, bias, running_mean, running_var


if __name__ == "__main__":
    key = jax.random.PRNGKey(0)
    ok = True

    cases = [
        ((2, 4, 16, 16), jnp.float32, 1e-6, 1e-6),   # primary small shape
        ((2, 3, 10, 13), jnp.float32, 1e-6, 1e-6),   # ragged: masked row+lane edges
        ((3, 8, 32, 32), jnp.float32, 1e-6, 1e-6),   # multi-block grid (row split)
        ((2, 4, 16, 16), jnp.bfloat16, 5e-2, 5e-2),  # bf16 compute path
    ]
    for shape, dtype, atol, rtol in cases:
        key, kx, kp = jax.random.split(key, 3)
        N, C, H, W = shape
        x = jax.random.normal(kx, shape, dtype=jnp.float32).astype(dtype)
        weight, bias, running_mean, running_var = _make_params(kp, C)

        out = frozen_batch_norm_2d(x, weight, bias, running_mean, running_var)
        out = jax.block_until_ready(out)
        ref = _reference(x, weight, bias, running_mean, running_var)

        ok &= out.shape == shape
        ok &= out.dtype == x.dtype
        ok &= bool(jnp.allclose(out.astype(jnp.float32), ref.astype(jnp.float32),
                                atol=atol, rtol=rtol))

    assert ok
    print("KERNEL_OK")
</pallas_src>

<mosaic_0001>
module attributes {stable_mosaic.version = 11 : i64} {
  func.func @_frozen_bn_kernel(%arg0: i32, %arg1: i32, %arg2: memref<8x2xf32, #tpu.memory_space<vmem>>, %arg3: memref<8x256xf32, #tpu.memory_space<vmem>>, %arg4: memref<8x256xf32, #tpu.memory_space<vmem>>) attributes {dimension_semantics = [#tpu.dimension_semantics<parallel>, #tpu.dimension_semantics<parallel>], iteration_bounds = array<i64: 1, 1>, scalar_prefetch = 0 : i64, scratch_operands = 0 : i64, tpu.core_type = #tpu.core_type<tc>, window_params = [{transform_indices = @transform_0, window_bounds = array<i64: 8, 2>}, {transform_indices = @transform_1, window_bounds = array<i64: 8, 256>}, {transform_indices = @transform_2, window_bounds = array<i64: 8, 256>}]} {
    %c0 = arith.constant 0 : index
    %c0_0 = arith.constant 0 : index
    %0 = vector.load %arg2[%c0, %c0_0] : memref<8x2xf32, #tpu.memory_space<vmem>>, vector<8x1xf32>
    %c0_1 = arith.constant 0 : index
    %c1 = arith.constant 1 : index
    %1 = vector.load %arg2[%c0_1, %c1] : memref<8x2xf32, #tpu.memory_space<vmem>>, vector<8x1xf32>
    %c0_2 = arith.constant 0 : index
    %c0_3 = arith.constant 0 : index
    %2 = vector.load %arg3[%c0_2, %c0_3] : memref<8x256xf32, #tpu.memory_space<vmem>>, vector<8x256xf32>
    %3 = vector.broadcast %0 : vector<8x1xf32> to vector<8x256xf32>
    %4 = arith.mulf %2, %3 : vector<8x256xf32>
    %5 = vector.broadcast %1 : vector<8x1xf32> to vector<8x256xf32>
    %6 = arith.addf %4, %5 : vector<8x256xf32>
    %c0_4 = arith.constant 0 : index
    %c0_5 = arith.constant 0 : index
    %7 = vector.load %arg4[%c0_4, %c0_5] : memref<8x256xf32, #tpu.memory_space<vmem>>, vector<8x256xf32>
    tpu.vector_store %arg4[%c0_4, %c0_5], %6 {strides = array<i32>} : memref<8x256xf32, #tpu.memory_space<vmem>>, vector<8x256xf32>,
    return
  }
  func.func @transform_0(%arg0: i32, %arg1: i32) -> (i32, i32) {
    %c0_i32 = arith.constant 0 : i32
    %c0_i32_0 = arith.constant 0 : i32
    return %arg0, %c0_i32 : i32, i32
  }
  func.func @transform_1(%arg0: i32, %arg1: i32) -> (i32, i32) {
    %c0_i32 = arith.constant 0 : i32
    return %arg0, %arg1 : i32, i32
  }
  func.func @transform_2(%arg0: i32, %arg1: i32) -> (i32, i32) {
    %c0_i32 = arith.constant 0 : i32
    return %arg0, %arg1 : i32, i32
  }
}

</mosaic_0001>

<llo_original>
// kernel: tpu_custom_call.1
$region0: #{tpu_custom_call.1}
  #allocation0 [shape = 'u32[]', space=smem, size = 0x4, offset = 0x4, fixed_abs, tag = 'smem constant byte address 0x4 - core index']
  #allocation1 [shape = 'u32[144,128]{1,0:T(1,128)}', space=vmem, size = 0x12000, scoped, tag = 'internal scratch']
  %s0 = inlined_call_operand.vmem [shape: f32[8,2], index: 0, kind: input, shape index: {}]
  %s1 = inlined_call_operand.hbm [shape: f32[8,256], index: 1, kind: input, shape index: {}]
  %s2 = inlined_call_operand.hbm [shape: f32[8,256], index: 2, kind: output, shape index: {}]
  %s3 = sld [smem:[#allocation0]]
  $region22: #{tpu_custom_call.1} parent=0
    _
  %s5 = ssub.s32 1, %s3
  %s6 = scalar_select 0, %s5, %s3
  $region1: #{tpu_custom_call.1} parent=0
    #allocation2 [shape = 'u8[8192]{0}', space=vmem, size = 0x2000, scoped, tag = 'input window, operand 1, single buffered']
    #allocation3 [shape = 's32[1]{0}', space=sflag, size = 0x4, scoped, tag = 'scoped memory for tpu_custom_call.1']
    #allocation4 [shape = 's32[1]{0}', space=sflag, size = 0x4, scoped, tag = 'scoped memory for tpu_custom_call.1']
    #allocation5 [shape = 'u8[8192]{0}', space=vmem, size = 0x2000, scoped, tag = 'output window, operand 0, single buffered']
    %7 = vsyncpa [#allocation3], 0
    %8 = vsyncpa [#allocation4], 0
    // Predicated region
    $region2: #{tpu_custom_call.1} parent=1 // pred_check
      _
    $region3: #{tpu_custom_call.1} parent=1 // pred_check_branch
      %10 = sbr.rel (0) target = $region5
    $region4: #{tpu_custom_call.1} parent=1 // pred_region
      _
    $region5: #{tpu_custom_call.1} parent=1 // pred_fallthru
      _
    // Predicated region
    $region6: #{tpu_custom_call.1} parent=1 // pred_check
      _
    $region7: #{tpu_custom_call.1} parent=1 // pred_check_branch
      %12 = sbr.rel (0) target = $region9
    $region8: #{tpu_custom_call.1} parent=1 // pred_region
      %s14 = ssub.s32 256, 256
      %15 = vsyncadd [#allocation3], %s14
      %s17 = sshll.u32 [#allocation2], 4
      %s18 = int_to_ptr.vmem [resolvable:$true] %s17
      %20 = dma.hbm_to_vmem [thread:$0]  %s1, 256, %s18, [#allocation3]
    $region9: #{tpu_custom_call.1} parent=1 // pred_fallthru
      _
    // Predicated region
    $region10: #{tpu_custom_call.1} parent=1 // pred_check
      _
    $region11: #{tpu_custom_call.1} parent=1 // pred_check_branch
      %22 = sbr.rel (0) target = $region13
    $region12: #{tpu_custom_call.1} parent=1 // pred_region
      %23 = dma.done [#allocation3], 256
    $region13: #{tpu_custom_call.1} parent=1 // pred_fallthru
      _
    %v24 = vld [vmem:[%s0] sm:$0xff]
    %v25 = vld [vmem:[#allocation2] sm:$0xff]
    %v26 = vld [vmem:[#allocation2 + $0x8] sm:$0xff]
    %28 = vset.pattern.permute.xlu0 0
    %29 = vperm.xlu0 %28, %v24
    %v30 = vpop.permute.xlu0 %29
    %v32 = vmul.f32 %v25, %v30
    %v33 = vmul.f32 %v26, %v30
    %34 = vset.pattern.permute.xlu0 1
    %35 = vperm.xlu0 %34, %v24
    %v36 = vpop.permute.xlu0 %35
    %v38 = vadd.f32 %v32, %v36
    %v39 = vadd.f32 %v33, %v36
    %40 = vst [vmem:[#allocation5] sm:$0xff] %v38
    %41 = vst [vmem:[#allocation5 + $0x8] sm:$0xff] %v39
    // Predicated region
    $region14: #{tpu_custom_call.1} parent=1 // pred_check
      _
    $region15: #{tpu_custom_call.1} parent=1 // pred_check_branch
      %43 = sbr.rel (0) target = $region17
    $region16: #{tpu_custom_call.1} parent=1 // pred_region
      %s45 = ssub.s32 256, 256
      %46 = vsyncadd [#allocation4], %s45
      %s48 = sshll.u32 [#allocation5], 4
      %s49 = int_to_ptr.vmem [resolvable:$true] %s48
      %51 = dma.vmem_to_hbm [thread:$0]  %s49, 256, %s2, [#allocation4]
    $region17: #{tpu_custom_call.1} parent=1 // pred_fallthru
      _
    // Predicated region
    $region18: #{tpu_custom_call.1} parent=1 // pred_check
      _
    $region19: #{tpu_custom_call.1} parent=1 // pred_check_branch
      %53 = sbr.rel (0) target = $region21
    $region20: #{tpu_custom_call.1} parent=1 // pred_region
      %54 = dma.done [#allocation4], 256
    $region21: #{tpu_custom_call.1} parent=1 // pred_fallthru
      _
    %55 = vsyncpa [#allocation3], 1
    %56 = vsyncpa [#allocation4], 1

</llo_original>
